<compile_context>
chip_gen: v6e
topology: v6e:2x2x1
jax: 0.10.0
libtpu: 0.0.40
codegen_flags: <defaults>
</compile_context>

<pallas_src>
import numpy as np
import jax
import jax.numpy as jnp
from jax.experimental import pallas as pl
from jax.experimental.pallas import tpu as pltpu

# ---- STFT parameters (Silero-VAD style) ----
FILTER_LENGTH = 256
HOP_LENGTH = 64
WIN_LENGTH = 256
CUTOFF = FILTER_LENGTH // 2 + 1          # 129 frequency bins
CPAD = 256                               # CUTOFF padded up to a lane-dense multiple of 128
R = FILTER_LENGTH // HOP_LENGTH          # 4 hop-chunks per analysis frame


def _round_up(x, m):
    return ((x + m - 1) // m) * m


def _make_basis_np():
    """Hann-windowed DFT rows: (real, imag), each (CUTOFF, FILTER_LENGTH) float32."""
    n = FILTER_LENGTH
    fourier = np.fft.fft(np.eye(n))
    real = np.real(fourier[:CUTOFF, :])
    imag = np.imag(fourier[:CUTOFF, :])
    # periodic ('fftbins=True') Hann window, as scipy.signal.get_window('hann', N)
    win = 0.5 - 0.5 * np.cos(2.0 * np.pi * np.arange(WIN_LENGTH) / WIN_LENGTH)
    return (real * win[None, :]).astype(np.float32), (imag * win[None, :]).astype(np.float32)


def make_fused_basis():
    """(FILTER_LENGTH, 2*CPAD): real rows in cols [0:CUTOFF], imag rows in [CPAD:CPAD+CUTOFF]."""
    real, imag = _make_basis_np()                        # (C, N) each
    fused = np.zeros((FILTER_LENGTH, 2 * CPAD), np.float32)
    fused[:, :CUTOFF] = real.T
    fused[:, CPAD:CPAD + CUTOFF] = imag.T
    return jnp.asarray(fused)


def _stft_mag_kernel(chunks_ref, basis_ref, out_ref):
    # chunks_ref: (1, M_pad, HOP)  hop-chunked padded audio for this batch (VMEM-resident per b)
    # basis_ref : (FILTER_LENGTH, 2*CPAD) fused real|imag DFT basis (constant index map -> resident)
    # out_ref   : (1, TM, CPAD)    magnitude tile (lane-dense store)
    i = pl.program_id(1)
    tm = out_ref.shape[1]
    base = pl.multiple_of(i * tm, 8)                     # aligned dynamic sublane offset
    # Window of hop chunks covering this tile's frames (frame k uses chunks k+1 .. k+4;
    # the "+1" inside the static slices below drops STFT frame 0, as in [:, :, 1:]).
    win = chunks_ref[0, pl.ds(base, tm + 8), :]          # (TM+8, HOP)

    y = None
    for j in range(R):                                   # static, unrolled split-K over hop chunks
        part = win[1 + j: 1 + j + tm, :]                 # (TM, HOP)
        contrib = jnp.dot(
            part,
            basis_ref[pl.ds(j * HOP_LENGTH, HOP_LENGTH), :],
            preferred_element_type=jnp.float32,
        )                                                # (TM, 2*CPAD)
        y = contrib if y is None else y + contrib

    r = y[:, :CPAD]
    im = y[:, CPAD:]
    out_ref[0] = jnp.sqrt(r * r + im * im)


def silero_stft(x, *, frame_tile=128):
    """x: (B, L) float32 audio -> (B, CUTOFF, T-1) magnitude spectrogram (frame 0 dropped)."""
    B, L = x.shape
    pad = FILTER_LENGTH // 2
    assert L > pad, "reflect padding requires L > filter_length // 2"

    xp = jnp.pad(x.astype(jnp.float32), ((0, 0), (pad, pad)), mode="reflect")
    Lp = L + 2 * pad
    T = (Lp - FILTER_LENGTH) // HOP_LENGTH + 1           # total STFT frames
    Tout = T - 1                                         # frames after dropping frame 0

    TM = min(frame_tile, _round_up(Tout, 8))             # rows per matmul tile (multiple of 8)
    num_tiles = pl.cdiv(Tout, TM)
    Tout_pad = num_tiles * TM
    M_pad = Tout_pad + 8                                 # hop chunks needed (incl. window slack)

    target = M_pad * HOP_LENGTH
    if target >= Lp:
        xq = jnp.pad(xp, ((0, 0), (0, target - Lp)))
    else:
        xq = xp[:, :target]                              # padded tail never feeds kept frames
    chunks = xq.reshape(B, M_pad, HOP_LENGTH)            # free reshape, no 4x frame blowup

    basis = make_fused_basis()                           # (256, 512) f32

    out = pl.pallas_call(
        _stft_mag_kernel,
        out_shape=jax.ShapeDtypeStruct((B, Tout_pad, CPAD), jnp.float32),
        grid_spec=pltpu.PrefetchScalarGridSpec(
            num_scalar_prefetch=0,
            grid=(B, num_tiles),
            in_specs=[
                # full chunk slab per batch; index map constant in the tile axis -> fetched
                # once per batch, stays resident across frame tiles
                pl.BlockSpec((1, M_pad, HOP_LENGTH), lambda b, i: (b, 0, 0)),
                # fused basis, constant index map -> fetched once
                pl.BlockSpec((FILTER_LENGTH, 2 * CPAD), lambda b, i: (0, 0)),
            ],
            out_specs=pl.BlockSpec((1, TM, CPAD), lambda b, i: (b, i, 0)),
        ),
        compiler_params=pltpu.CompilerParams(
            dimension_semantics=("parallel", "parallel"),
            vmem_limit_bytes=32 * 1024 * 1024,           # explicit scoped-VMEM budget (v5e default is 16 MiB)
        ),
    )(chunks, basis)

    # slice off padded rows / padded frequency lanes, go to PyTorch channel-major layout
    mag = out[:, :Tout, :CUTOFF]                         # (B, Tout, 129)
    return jnp.transpose(mag, (0, 2, 1))                 # (B, 129, Tout)

# NOTE: bf16 inputs with f32 accumulation (v6e/v7x MXU-native) are a further option once the
# kernel is compute-bound; kept f32 here to preserve the reference tolerance.


if __name__ == "__main__":
    key = jax.random.PRNGKey(0)
    B, L = 2, 512
    x = jax.random.normal(key, (B, L), dtype=jnp.float32)

    y = jax.block_until_ready(silero_stft(x))

    # plain-JAX reference (same framing + windowed DFT + magnitude + frame-0 drop)
    pad = FILTER_LENGTH // 2
    xp = jnp.pad(x, ((0, 0), (pad, pad)), mode="reflect")
    T = (L + 2 * pad - FILTER_LENGTH) // HOP_LENGTH + 1
    idx = jnp.arange(T)[:, None] * HOP_LENGTH + jnp.arange(FILTER_LENGTH)[None, :]
    frames = xp[:, idx]
    real, imag = _make_basis_np()
    br = jnp.asarray(real.T)
    bi = jnp.asarray(imag.T)
    ref = jnp.sqrt(jnp.einsum("btn,nc->btc", frames, br) ** 2
                   + jnp.einsum("btn,nc->btc", frames, bi) ** 2)
    ref = jnp.transpose(ref, (0, 2, 1))[:, :, 1:]

    np.testing.assert_allclose(np.asarray(y), np.asarray(ref), rtol=3e-4, atol=2e-3)
    assert y.shape == (B, CUTOFF, T - 1)
    print("KERNEL_OK")
</pallas_src>

<mosaic_0001>
module attributes {stable_mosaic.version = 11 : i64} {
  func.func @_stft_mag_kernel(%arg0: i32, %arg1: i32, %arg2: memref<1x16x64xf32, #tpu.memory_space<vmem>>, %arg3: memref<256x512xf32, #tpu.memory_space<vmem>>, %arg4: memref<1x8x256xf32, #tpu.memory_space<vmem>>) attributes {dimension_semantics = [#tpu.dimension_semantics<parallel>, #tpu.dimension_semantics<parallel>], iteration_bounds = array<i64: 2, 1>, scalar_prefetch = 0 : i64, scratch_operands = 0 : i64, tpu.core_type = #tpu.core_type<tc>, window_params = [{transform_indices = @transform_0, window_bounds = array<i64: 1, 16, 64>}, {pipeline_mode = #tpu.pipeline_mode<synchronous>, transform_indices = @transform_1, window_bounds = array<i64: 256, 512>}, {transform_indices = @transform_2, window_bounds = array<i64: 1, 8, 256>}]} {
    %c8_i32 = arith.constant 8 : i32
    %0 = arith.muli %arg1, %c8_i32 : i32
    %1 = tpu.assume_multiple %0, 8 : i32
    %c0 = arith.constant 0 : index
    %2 = arith.index_cast %1 : i32 to index
    %c0_0 = arith.constant 0 : index
    %3 = vector.load %arg2[%c0, %2, %c0_0] : memref<1x16x64xf32, #tpu.memory_space<vmem>>, vector<1x16x64xf32>
    %4 = vector.shape_cast %3 : vector<1x16x64xf32> to vector<16x64xf32>
    %5 = vector.extract_strided_slice %4 {offsets = [1, 0], sizes = [8, 64], strides = [1, 1]} : vector<16x64xf32> to vector<8x64xf32>
    %c0_1 = arith.constant 0 : index
    %c0_2 = arith.constant 0 : index
    %6 = vector.load %arg3[%c0_1, %c0_2] : memref<256x512xf32, #tpu.memory_space<vmem>>, vector<64x512xf32>
    %cst = arith.constant dense<0.000000e+00> : vector<8x512xf32>
    %7 = tpu.matmul %5, %6, %cst {dimension_numbers = #tpu.dot_dimension_numbers<[1], [0], [0], [1], [0, 0, 1, 1], [], []>} : vector<8x64xf32>, vector<64x512xf32>, vector<8x512xf32> -> vector<8x512xf32>
    %8 = vector.extract_strided_slice %4 {offsets = [2, 0], sizes = [8, 64], strides = [1, 1]} : vector<16x64xf32> to vector<8x64xf32>
    %c64 = arith.constant 64 : index
    %c0_3 = arith.constant 0 : index
    %9 = vector.load %arg3[%c64, %c0_3] : memref<256x512xf32, #tpu.memory_space<vmem>>, vector<64x512xf32>
    %cst_4 = arith.constant dense<0.000000e+00> : vector<8x512xf32>
    %10 = tpu.matmul %8, %9, %cst_4 {dimension_numbers = #tpu.dot_dimension_numbers<[1], [0], [0], [1], [0, 0, 1, 1], [], []>} : vector<8x64xf32>, vector<64x512xf32>, vector<8x512xf32> -> vector<8x512xf32>
    %11 = arith.addf %7, %10 : vector<8x512xf32>
    %12 = vector.extract_strided_slice %4 {offsets = [3, 0], sizes = [8, 64], strides = [1, 1]} : vector<16x64xf32> to vector<8x64xf32>
    %c128 = arith.constant 128 : index
    %c0_5 = arith.constant 0 : index
    %13 = vector.load %arg3[%c128, %c0_5] : memref<256x512xf32, #tpu.memory_space<vmem>>, vector<64x512xf32>
    %cst_6 = arith.constant dense<0.000000e+00> : vector<8x512xf32>
    %14 = tpu.matmul %12, %13, %cst_6 {dimension_numbers = #tpu.dot_dimension_numbers<[1], [0], [0], [1], [0, 0, 1, 1], [], []>} : vector<8x64xf32>, vector<64x512xf32>, vector<8x512xf32> -> vector<8x512xf32>
    %15 = arith.addf %11, %14 : vector<8x512xf32>
    %16 = vector.extract_strided_slice %4 {offsets = [4, 0], sizes = [8, 64], strides = [1, 1]} : vector<16x64xf32> to vector<8x64xf32>
    %c192 = arith.constant 192 : index
    %c0_7 = arith.constant 0 : index
    %17 = vector.load %arg3[%c192, %c0_7] : memref<256x512xf32, #tpu.memory_space<vmem>>, vector<64x512xf32>
    %cst_8 = arith.constant dense<0.000000e+00> : vector<8x512xf32>
    %18 = tpu.matmul %16, %17, %cst_8 {dimension_numbers = #tpu.dot_dimension_numbers<[1], [0], [0], [1], [0, 0, 1, 1], [], []>} : vector<8x64xf32>, vector<64x512xf32>, vector<8x512xf32> -> vector<8x512xf32>
    %19 = arith.addf %15, %18 : vector<8x512xf32>
    %20 = vector.extract_strided_slice %19 {offsets = [0, 0], sizes = [8, 256], strides = [1, 1]} : vector<8x512xf32> to vector<8x256xf32>
    %21 = vector.extract_strided_slice %19 {offsets = [0, 256], sizes = [8, 256], strides = [1, 1]} : vector<8x512xf32> to vector<8x256xf32>
    %22 = arith.mulf %20, %20 : vector<8x256xf32>
    %23 = arith.mulf %21, %21 : vector<8x256xf32>
    %24 = arith.addf %22, %23 : vector<8x256xf32>
    %25 = math.sqrt %24 : vector<8x256xf32>
    %c0_9 = arith.constant 0 : index
    %c0_10 = arith.constant 0 : index
    %c0_11 = arith.constant 0 : index
    %26 = vector.load %arg4[%c0_9, %c0_10, %c0_11] : memref<1x8x256xf32, #tpu.memory_space<vmem>>, vector<1x8x256xf32>
    %27 = vector.shape_cast %26 : vector<1x8x256xf32> to vector<8x256xf32>
    %28 = vector.shape_cast %25 : vector<8x256xf32> to vector<1x8x256xf32>
    tpu.vector_store %arg4[%c0_9, %c0_10, %c0_11], %28 {strides = array<i32>} : memref<1x8x256xf32, #tpu.memory_space<vmem>>, vector<1x8x256xf32>,
    return
  }
  func.func @transform_0(%arg0: i32, %arg1: i32) -> (i32, i32, i32) {
    %c0_i32 = arith.constant 0 : i32
    %c0_i32_0 = arith.constant 0 : i32
    %c0_i32_1 = arith.constant 0 : i32
    return %arg0, %c0_i32, %c0_i32_0 : i32, i32, i32
  }
  func.func @transform_1(%arg0: i32, %arg1: i32) -> (i32, i32) {
    %c0_i32 = arith.constant 0 : i32
    %c0_i32_0 = arith.constant 0 : i32
    %c0_i32_1 = arith.constant 0 : i32
    return %c0_i32, %c0_i32_0 : i32, i32
  }
  func.func @transform_2(%arg0: i32, %arg1: i32) -> (i32, i32, i32) {
    %c0_i32 = arith.constant 0 : i32
    %c0_i32_0 = arith.constant 0 : i32
    return %arg0, %arg1, %c0_i32 : i32, i32, i32
  }
}

</mosaic_0001>

<llo_original>
// kernel: tpu_custom_call.1
$region0: #{tpu_custom_call.1}
  #allocation0 [shape = 'u32[]', space=smem, size = 0x4, offset = 0x4, fixed_abs, tag = 'smem constant byte address 0x4 - core index']
  #allocation1 [shape = 'u32[144,128]{1,0:T(1,128)}', space=vmem, size = 0x12000, scoped, tag = 'internal scratch']
  %s0 = inlined_call_operand.hbm [shape: f32[2,16,64], index: 0, kind: input, shape index: {}]
  %s1 = inlined_call_operand.hbm [shape: f32[256,512], index: 1, kind: input, shape index: {}]
  %s2 = inlined_call_operand.hbm [shape: f32[2,8,256], index: 2, kind: output, shape index: {}]
  %s3 = sld [smem:[#allocation0]]
  $region49: #{tpu_custom_call.1} parent=0
    _
  %s5 = ssub.s32 1, %s3
  %s6 = scalar_select 0, %s5, %s3
  $region1: #{tpu_custom_call.1} parent=0
    #allocation2 [shape = 'u8[16384]{0}', space=vmem, size = 0x4000, scoped, tag = 'input window, operand 0']
    #allocation3 [shape = 's32[2]{0}', space=sflag, size = 0x8, scoped, tag = 'scoped memory for tpu_custom_call.1']
    #allocation4 [shape = 's32[2]{0}', space=sflag, size = 0x8, scoped, tag = 'scoped memory for tpu_custom_call.1']
    #allocation5 [shape = 'u8[524288]{0}', space=vmem, size = 0x80000, scoped, tag = 'input window, operand 1, single buffered']
    #allocation6 [shape = 's32[1]{0}', space=sflag, size = 0x4, scoped, tag = 'scoped memory for tpu_custom_call.1']
    #allocation7 [shape = 'u8[16384]{0}', space=vmem, size = 0x4000, scoped, tag = 'output window, operand 0']
    %7 = vsyncpa [#allocation3], 0
    %s8 = scalar_lea.sflag [#allocation3], 1
    %9 = vsyncpa %s8, 0
    %10 = vsyncpa [#allocation6], 0
    %11 = vsyncpa [#allocation4], 0
    %s12 = scalar_lea.sflag [#allocation4], 1
    %13 = vsyncpa %s12, 0
    loop: start=0, step=1, limit=4
    $region2: #{tpu_custom_call.1} parent=1 // loop_pre_header
      _
    $region3: #{tpu_custom_call.1} parent=1 // loop_header
      %s15 = sphi 0, %s19
      %p16 = scmp.ge.s32.totalorder %s15, 4
      %s22 = sphi 0, %s34
      %s23 = sphi 0, %s30
      %s24 = sphi 0, %s22
      %s25 = sphi 0, %s23
      %s26 = sphi 0, %s24
      %s27 = sphi 0, %s25
      %s37 = sphi 0, %s39
      %s40 = sphi 0, %s37
      %s41 = sphi 0, %s40
      %s57 = sphi 0, %s41
      %s61 = sphi 0, %s61
      %s63 = sphi 0, %s61
      %s64 = sphi 0, %s63
      %s78 = sphi 0, %s64
      %s86 = sphi 0, %s88
      %s89 = sphi 0, %s86
      %s90 = sphi 0, %s89
      %s106 = sphi 0, %s90
    $region4: #{tpu_custom_call.1} parent=1 // loop_header_branch
      %18 = sbr.rel (%p16) target = $region8
    $region5: #{tpu_custom_call.1} parent=1 // loop_body
      %s20 = ssub.s32 %s15, 1
      %s21 = ssub.s32 %s15, 2
      %s28 = sadd.s32 1, %s23
      %p29 = scmp.ge.s32.totalorder %s28, 1
      %s30 = scalar_select %p29, 0, %s28
      %s31 = sadd.s32 1, %s22
      %s32 = scalar_select %p29, %s31, %s22
      %p33 = scmp.ge.s32.totalorder %s32, 2
      %s34 = scalar_select %p33, 0, %s32
      %s35 = ssub.s32 %s22, %s34
      %p36 = scmp.eq.s32.totalorder %s35, 0
      %s38 = sadd.s32 %s37, 1
      %s39 = scalar_select %p36, %s37, %s38
      %p42 = pneg %p36
      %p43 = scmp.eq.s32.totalorder %s15, 1
      %p44 = por %p42, %p43
      %p45 = scmp.ne.s32.totalorder %s37, %s40
      %p46 = scmp.eq.s32.totalorder %s15, 0
      %p47 = por %p45, %p46
      %p48 = scmp.ne.s32.totalorder %s37, %s40
      %p49 = scmp.eq.s32.totalorder %s20, 1
      %p50 = por %p48, %p49
      %p51 = scmp.ne.s32.totalorder %s40, %s41
      %p52 = scmp.eq.s32.totalorder %s20, 0
      %p53 = por %p51, %p52
      %p54 = scmp.ne.s32.totalorder %s40, %s41
      %p55 = scmp.eq.s32.totalorder %s21, 1
      %p56 = por %p54, %p55
      %p58 = scmp.ne.s32.totalorder %s41, %s57
      %p59 = scmp.eq.s32.totalorder %s21, 0
      %p60 = por %p58, %p59
      %s62 = sadd.s32 %s61, 1
      %p65 = scmp.eq.s32.totalorder %s15, 1
      %p66 = scmp.ne.s32.totalorder %s61, %s63
      %p67 = scmp.eq.s32.totalorder %s15, 0
      %p68 = por %p66, %p67
      %p69 = scmp.ne.s32.totalorder %s61, %s63
      %p70 = scmp.eq.s32.totalorder %s20, 1
      %p71 = por %p69, %p70
      %p72 = scmp.ne.s32.totalorder %s63, %s64
      %p73 = scmp.eq.s32.totalorder %s20, 0
      %p74 = por %p72, %p73
      %p75 = scmp.ne.s32.totalorder %s63, %s64
      %p76 = scmp.eq.s32.totalorder %s21, 1
      %p77 = por %p75, %p76
      %p79 = scmp.ne.s32.totalorder %s64, %s78
      %p80 = scmp.eq.s32.totalorder %s21, 0
      %p81 = por %p79, %p80
      %s82 = ssub.s32 %s22, %s34
      %s83 = ssub.s32 %s23, %s30
      %s84 = sor.u32 %s82, %s83
      %p85 = scmp.eq.s32.totalorder %s84, 0
      %s87 = sadd.s32 %s86, 1
      %s88 = scalar_select %p85, %s86, %s87
      %p91 = pneg %p85
      %p92 = scmp.eq.s32.totalorder %s15, 1
      %p93 = por %p91, %p92
      %p94 = scmp.ne.s32.totalorder %s86, %s89
      %p95 = scmp.eq.s32.totalorder %s15, 0
      %p96 = por %p94, %p95
      %p97 = scmp.ne.s32.totalorder %s86, %s89
      %p98 = scmp.eq.s32.totalorder %s20, 1
      %p99 = por %p97, %p98
      %p100 = scmp.ne.s32.totalorder %s89, %s90
      %p101 = scmp.eq.s32.totalorder %s20, 0
      %p102 = por %p100, %p101
      %p103 = scmp.ne.s32.totalorder %s89, %s90
      %p104 = scmp.eq.s32.totalorder %s21, 1
      %p105 = por %p103, %p104
      %p107 = scmp.ne.s32.totalorder %s90, %s106
      %p108 = scmp.eq.s32.totalorder %s21, 0
      %p109 = por %p107, %p108
      %p110 = scmp.le.s32.totalorder 1, %s15
      %p111 = scmp.lt.s32.totalorder %s15, 3
      %p112 = pnand %p110, %p111
      %p113 = pneg %p112
      // Predicated region
      $region9: #{tpu_custom_call.1} parent=5 // pred_check
        _
      $region10: #{tpu_custom_call.1} parent=5 // pred_check_branch
        %115 = sbr.rel (%p112) target = $region12
      $region11: #{tpu_custom_call.1} parent=5 // pred_region
        %s116 = ssub.s32 %s15, 1
        // Predicated region
        $region13: #{tpu_custom_call.1} parent=11 // pred_check
          %p117 = pneg %p74
        $region14: #{tpu_custom_call.1} parent=11 // pred_check_branch
          %119 = sbr.rel (%p117) target = $region16
        $region15: #{tpu_custom_call.1} parent=11 // pred_region
          %s121 = ssub.s32 16384, 16384
          %122 = vsyncadd [#allocation6], %s121
          %s123 = sshll.u32 [#allocation5], 4
          %s124 = int_to_ptr.vmem [resolvable:$true] %s123
          %129 = dma.hbm_to_vmem [thread:$0]  %s1, 16384, %s124, [#allocation6], 512, 512, 32
        $region16: #{tpu_custom_call.1} parent=11 // pred_fallthru
          _
      $region12: #{tpu_custom_call.1} parent=5 // pred_fallthru
        _
      %p130 = scmp.lt.s32.totalorder %s15, 2
      // Predicated region
      $region17: #{tpu_custom_call.1} parent=5 // pred_check
        %p131 = pneg %p130
      $region18: #{tpu_custom_call.1} parent=5 // pred_check_branch
        %133 = sbr.rel (%p131) target = $region20
      $region19: #{tpu_custom_call.1} parent=5 // pred_region
        // Predicated region
        $region21: #{tpu_custom_call.1} parent=19 // pred_check
          %p134 = pneg %p47
        $region22: #{tpu_custom_call.1} parent=19 // pred_check_branch
          %136 = sbr.rel (%p134) target = $region24
        $region23: #{tpu_custom_call.1} parent=19 // pred_region
          %s137 = sand.u32 %s37, 1
          %s138 = scalar_lea.sflag [#allocation3], %s137
          %s139 = sand.u32 %s37, 1
          %s140 = smul.addr %s139, 16
          %s141 = scalar_lea.vmem [#allocation2], %s140
          %s143 = ssub.s32 256, 256
          %144 = vsyncadd %s138, %s143
          %s145 = smul.addr %s22, 2
          %s146 = smul.addr %s145, 128
          %s147 = scalar_lea.hbm %s0, %s146
          %s148 = sshll.u32 %s141, 4
          %s149 = int_to_ptr.vmem [resolvable:$true] %s148
          %154 = dma.hbm_to_vmem [thread:$0]  %s147, 256, %s149, %s138, 128, 128, 8
        $region24: #{tpu_custom_call.1} parent=19 // pred_fallthru
          _
      $region20: #{tpu_custom_call.1} parent=5 // pred_fallthru
        _
      %p155 = scmp.le.s32.totalorder 1, %s15
      %p156 = scmp.lt.s32.totalorder %s15, 3
      %p157 = pnand %p155, %p156
      %p158 = pneg %p157
      // Predicated region
      $region25: #{tpu_custom_call.1} parent=5 // pred_check
        _
      $region26: #{tpu_custom_call.1} parent=5 // pred_check_branch
        %160 = sbr.rel (%p157) target = $region28
      $region27: #{tpu_custom_call.1} parent=5 // pred_region
        %s161 = ssub.s32 %s15, 1
        %s162 = sand.u32 %s40, 1
        %s163 = scalar_lea.sflag [#allocation3], %s162
        %s164 = sand.u32 %s40, 1
        %s165 = smul.addr %s164, 16
        %s166 = scalar_lea.vmem [#allocation2], %s165
        // Predicated region
        $region29: #{tpu_custom_call.1} parent=27 // pred_check
          %p167 = pneg %p53
        $region30: #{tpu_custom_call.1} parent=27 // pred_check_branch
          %169 = sbr.rel (%p167) target = $region32
        $region31: #{tpu_custom_call.1} parent=27 // pred_region
          %170 = dma.done %s163, 256
        $region32: #{tpu_custom_call.1} parent=27 // pred_fallthru
          _
        // Predicated region
        $region33: #{tpu_custom_call.1} parent=27 // pred_check
          %p171 = pneg %p74
        $region34: #{tpu_custom_call.1} parent=27 // pred_check_branch
          %173 = sbr.rel (%p171) target = $region36
        $region35: #{tpu_custom_call.1} parent=27 // pred_region
          %174 = dma.done [#allocation6], 16384
        $region36: #{tpu_custom_call.1} parent=27 // pred_fallthru
          _
        %s175 = sand.u32 %s40, 1
        %s176 = scalar_lea.sflag [#allocation3], %s175
        %s177 = sand.u32 %s40, 1
        %s178 = smul.addr %s177, 16
        %s179 = scalar_lea.vmem [#allocation2], %s178
        %p180 = pneg %p53
        %p181 = pneg %p50
        %p182 = pneg %p74
        %p183 = pneg %p71
        %p184 = pneg %p102
        %p185 = pneg %p99
        %s186 = sand.u32 %s89, 1
        %s187 = scalar_lea.sflag [#allocation4], %s186
        %s188 = sand.u32 %s89, 1
        %s189 = smul.addr %s188, 16
        %s190 = scalar_lea.vmem [#allocation7], %s189
        %s191 = smul.u32 %s25, 8
        %s192 = scalar_lea.vmem %s166, %s191 [#allocation2]
        %v193 = vld [vmem:[%s192] sm:$0xff]
        %v194 = vld [vmem:[%s192 + $0x8] sm:$0xff]
        %v195 = vld [vmem:[#allocation5] sm:$0xff]
        %v196 = vld [vmem:[#allocation5 + $0x8] sm:$0xff]
        %v197 = vld [vmem:[#allocation5 + $0x10] sm:$0xff]
        %v198 = vld [vmem:[#allocation5 + $0x18] sm:$0xff]
        %v199 = vld [vmem:[#allocation5 + $0x20] sm:$0xff]
        %v200 = vld [vmem:[#allocation5 + $0x28] sm:$0xff]
        %v201 = vld [vmem:[#allocation5 + $0x30] sm:$0xff]
        %v202 = vld [vmem:[#allocation5 + $0x38] sm:$0xff]
        %v203 = vld [vmem:[#allocation5 + $0x40] sm:$0xff]
        %v204 = vld [vmem:[#allocation5 + $0x48] sm:$0xff]
        %v205 = vld [vmem:[#allocation5 + $0x50] sm:$0xff]
        %v206 = vld [vmem:[#allocation5 + $0x58] sm:$0xff]
        %v207 = vld [vmem:[#allocation5 + $0x60] sm:$0xff]
        %v208 = vld [vmem:[#allocation5 + $0x68] sm:$0xff]
        %v209 = vld [vmem:[#allocation5 + $0x70] sm:$0xff]
        %v210 = vld [vmem:[#allocation5 + $0x78] sm:$0xff]
        %v211 = vld [vmem:[#allocation5 + $0x80] sm:$0xff]
        %v212 = vld [vmem:[#allocation5 + $0x88] sm:$0xff]
        %v213 = vld [vmem:[#allocation5 + $0x90] sm:$0xff]
        %v214 = vld [vmem:[#allocation5 + $0x98] sm:$0xff]
        %v215 = vld [vmem:[#allocation5 + $0xa0] sm:$0xff]
        %v216 = vld [vmem:[#allocation5 + $0xa8] sm:$0xff]
        %v217 = vld [vmem:[#allocation5 + $0xb0] sm:$0xff]
        %v218 = vld [vmem:[#allocation5 + $0xb8] sm:$0xff]
        %v219 = vld [vmem:[#allocation5 + $0xc0] sm:$0xff]
        %v220 = vld [vmem:[#allocation5 + $0xc8] sm:$0xff]
        %v221 = vld [vmem:[#allocation5 + $0xd0] sm:$0xff]
        %v222 = vld [vmem:[#allocation5 + $0xd8] sm:$0xff]
        %v223 = vld [vmem:[#allocation5 + $0xe0] sm:$0xff]
        %v224 = vld [vmem:[#allocation5 + $0xe8] sm:$0xff]
        %v225 = vld [vmem:[#allocation5 + $0xf0] sm:$0xff]
        %v226 = vld [vmem:[#allocation5 + $0xf8] sm:$0xff]
        %v227 = vld [vmem:[#allocation5 + $0x100] sm:$0xff]
        %v228 = vld [vmem:[#allocation5 + $0x108] sm:$0xff]
        %v229 = vld [vmem:[#allocation5 + $0x110] sm:$0xff]
        %v230 = vld [vmem:[#allocation5 + $0x118] sm:$0xff]
        %v231 = vld [vmem:[#allocation5 + $0x120] sm:$0xff]
        %v232 = vld [vmem:[#allocation5 + $0x128] sm:$0xff]
        %v233 = vld [vmem:[#allocation5 + $0x130] sm:$0xff]
        %v234 = vld [vmem:[#allocation5 + $0x138] sm:$0xff]
        %v235 = vld [vmem:[#allocation5 + $0x140] sm:$0xff]
        %v236 = vld [vmem:[#allocation5 + $0x148] sm:$0xff]
        %v237 = vld [vmem:[#allocation5 + $0x150] sm:$0xff]
        %v238 = vld [vmem:[#allocation5 + $0x158] sm:$0xff]
        %v239 = vld [vmem:[#allocation5 + $0x160] sm:$0xff]
        %v240 = vld [vmem:[#allocation5 + $0x168] sm:$0xff]
        %v241 = vld [vmem:[#allocation5 + $0x170] sm:$0xff]
        %v242 = vld [vmem:[#allocation5 + $0x178] sm:$0xff]
        %v243 = vld [vmem:[#allocation5 + $0x180] sm:$0xff]
        %v244 = vld [vmem:[#allocation5 + $0x188] sm:$0xff]
        %v245 = vld [vmem:[#allocation5 + $0x190] sm:$0xff]
        %v246 = vld [vmem:[#allocation5 + $0x198] sm:$0xff]
        %v247 = vld [vmem:[#allocation5 + $0x1a0] sm:$0xff]
        %v248 = vld [vmem:[#allocation5 + $0x1a8] sm:$0xff]
        %v249 = vld [vmem:[#allocation5 + $0x1b0] sm:$0xff]
        %v250 = vld [vmem:[#allocation5 + $0x1b8] sm:$0xff]
        %v251 = vld [vmem:[#allocation5 + $0x1c0] sm:$0xff]
        %v252 = vld [vmem:[#allocation5 + $0x1c8] sm:$0xff]
        %v253 = vld [vmem:[#allocation5 + $0x1d0] sm:$0xff]
        %v254 = vld [vmem:[#allocation5 + $0x1d8] sm:$0xff]
        %v255 = vld [vmem:[#allocation5 + $0x1e0] sm:$0xff]
        %v256 = vld [vmem:[#allocation5 + $0x1e8] sm:$0xff]
        %v257 = vld [vmem:[#allocation5 + $0x1f0] sm:$0xff]
        %v258 = vld [vmem:[#allocation5 + $0x1f8] sm:$0xff]
        %vm261 = vcmask 1045504
        %v262 = vrot.slane %v193, 2
        %v263 = vrot.slane %v194, 2
        %v264 = vsel %vm261, %v262, %v263
        %vm265 = vcmask 523264
        %v266 = vsel %vm265, %v264, 0
        %268 = vmatprep.subr.mxu0 0.0
        %269 = vmatpush1.msra.mxu0 0.0
        %270 = vmatprep.subr.mxu0 0.0
        %271 = vmatpush1.msra.mxu0 0.0
        %272 = vmatprep.subr.mxu0 0.0
        %273 = vmatpush1.msra.mxu0 0.0
        %274 = vmatprep.subr.mxu0 0.0
        %275 = vmatpush1.msra.mxu0 0.0
        %276 = vmatprep.subr.mxu0 0.0
        %277 = vmatpush1.msra.mxu0 0.0
        %278 = vmatprep.subr.mxu0 0.0
        %279 = vmatpush1.msra.mxu0 0.0
        %280 = vmatprep.subr.mxu0 0.0
        %281 = vmatpush1.msra.mxu0 0.0
        %282 = vmatprep.subr.mxu0 0.0
        %283 = vmatpush1.msra.mxu0 0.0
        %284 = vmatprep.subr.mxu0 %v256
        %285 = vmatpush1.msra.mxu0 %v255
        %286 = vmatprep.subr.mxu0 %v252
        %287 = vmatpush1.msra.mxu0 %v251
        %288 = vmatprep.subr.mxu0 %v248
        %289 = vmatpush1.msra.mxu0 %v247
        %290 = vmatprep.subr.mxu0 %v244
        %291 = vmatpush1.msra.mxu0 %v243
        %292 = vmatprep.subr.mxu0 %v240
        %293 = vmatpush1.msra.mxu0 %v239
        %294 = vmatprep.subr.mxu0 %v236
        %295 = vmatpush1.msra.mxu0 %v235
        %296 = vmatprep.subr.mxu0 %v232
        %297 = vmatpush1.msra.mxu0 %v231
        %298 = vmatprep.subr.mxu0 %v228
        %299 = vmatpush1.msra.mxu0 %v227
        %300 = vmatprep.subr.mxu0 0.0
        %301 = vmatpush2.msra.mxu0 0.0
        %302 = vmatprep.subr.mxu0 0.0
        %303 = vmatpush2.msra.mxu0 0.0
        %304 = vmatprep.subr.mxu0 0.0
        %305 = vmatpush2.msra.mxu0 0.0
        %306 = vmatprep.subr.mxu0 0.0
        %307 = vmatpush2.msra.mxu0 0.0
        %308 = vmatprep.subr.mxu0 0.0
        %309 = vmatpush2.msra.mxu0 0.0
        %310 = vmatprep.subr.mxu0 0.0
        %311 = vmatpush2.msra.mxu0 0.0
        %312 = vmatprep.subr.mxu0 0.0
        %313 = vmatpush2.msra.mxu0 0.0
        %314 = vmatprep.subr.mxu0 0.0
        %315 = vmatpush2.msra.mxu0 0.0
        %316 = vmatprep.subr.mxu0 0.0
        %317 = vmatpush2.msra.mxu0 0.0
        %318 = vmatprep.subr.mxu0 0.0
        %319 = vmatpush2.msra.mxu0 0.0
        %320 = vmatprep.subr.mxu0 0.0
        %321 = vmatpush2.msra.mxu0 0.0
        %322 = vmatprep.subr.mxu0 0.0
        %323 = vmatpush2.msra.mxu0 0.0
        %324 = vmatprep.subr.mxu0 0.0
        %325 = vmatpush2.msra.mxu0 0.0
        %326 = vmatprep.subr.mxu0 0.0
        %327 = vmatpush2.msra.mxu0 0.0
        %328 = vmatprep.subr.mxu0 0.0
        %329 = vmatpush2.msra.mxu0 0.0
        %330 = vmatprep.subr.mxu0 0.0
        %331 = vmatpush2.msra.mxu0 0.0
        %332 = vmatprep.mubr.f32.mxu0 0.0
        %333 = vmatmul.mubr.f32.gmra.mxu0 %v266
        %v334 = vpop.f32.mrf.mxu0
        %v335 = vadd.f32 0.0, %v334
        %v336 = vpop.f32.mrf.mxu0
        %v337 = vadd.f32 0.0, %v336
        %338 = vdwg.mxu0
        %339 = vmatprep.subr.mxu0 0.0
        %340 = vmatpush1.msra.mxu0 0.0
        %341 = vmatprep.subr.mxu0 0.0
        %342 = vmatpush1.msra.mxu0 0.0
        %343 = vmatprep.subr.mxu0 0.0
        %344 = vmatpush1.msra.mxu0 0.0
        %345 = vmatprep.subr.mxu0 0.0
        %346 = vmatpush1.msra.mxu0 0.0
        %347 = vmatprep.subr.mxu0 0.0
        %348 = vmatpush1.msra.mxu0 0.0
        %349 = vmatprep.subr.mxu0 0.0
        %350 = vmatpush1.msra.mxu0 0.0
        %351 = vmatprep.subr.mxu0 0.0
        %352 = vmatpush1.msra.mxu0 0.0
        %353 = vmatprep.subr.mxu0 0.0
        %354 = vmatpush1.msra.mxu0 0.0
        %355 = vmatprep.subr.mxu0 %v258
        %356 = vmatpush1.msra.mxu0 %v257
        %357 = vmatprep.subr.mxu0 %v254
        %358 = vmatpush1.msra.mxu0 %v253
        %359 = vmatprep.subr.mxu0 %v250
        %360 = vmatpush1.msra.mxu0 %v249
        %361 = vmatprep.subr.mxu0 %v246
        %362 = vmatpush1.msra.mxu0 %v245
        %363 = vmatprep.subr.mxu0 %v242
        %364 = vmatpush1.msra.mxu0 %v241
        %365 = vmatprep.subr.mxu0 %v238
        %366 = vmatpush1.msra.mxu0 %v237
        %367 = vmatprep.subr.mxu0 %v234
        %368 = vmatpush1.msra.mxu0 %v233
        %369 = vmatprep.subr.mxu0 %v230
        %370 = vmatpush1.msra.mxu0 %v229
        %371 = vmatprep.subr.mxu0 0.0
        %372 = vmatpush2.msra.mxu0 0.0
        %373 = vmatprep.subr.mxu0 0.0
        %374 = vmatpush2.msra.mxu0 0.0
        %375 = vmatprep.subr.mxu0 0.0
        %376 = vmatpush2.msra.mxu0 0.0
        %377 = vmatprep.subr.mxu0 0.0
        %378 = vmatpush2.msra.mxu0 0.0
        %379 = vmatprep.subr.mxu0 0.0
        %380 = vmatpush2.msra.mxu0 0.0
        %381 = vmatprep.subr.mxu0 0.0
        %382 = vmatpush2.msra.mxu0 0.0
        %383 = vmatprep.subr.mxu0 0.0
        %384 = vmatpush2.msra.mxu0 0.0
        %385 = vmatprep.subr.mxu0 0.0
        %386 = vmatpush2.msra.mxu0 0.0
        %387 = vmatprep.subr.mxu0 0.0
        %388 = vmatpush2.msra.mxu0 0.0
        %389 = vmatprep.subr.mxu0 0.0
        %390 = vmatpush2.msra.mxu0 0.0
        %391 = vmatprep.subr.mxu0 0.0
        %392 = vmatpush2.msra.mxu0 0.0
        %393 = vmatprep.subr.mxu0 0.0
        %394 = vmatpush2.msra.mxu0 0.0
        %395 = vmatprep.subr.mxu0 0.0
        %396 = vmatpush2.msra.mxu0 0.0
        %397 = vmatprep.subr.mxu0 0.0
        %398 = vmatpush2.msra.mxu0 0.0
        %399 = vmatprep.subr.mxu0 0.0
        %400 = vmatpush2.msra.mxu0 0.0
        %401 = vmatprep.subr.mxu0 0.0
        %402 = vmatpush2.msra.mxu0 0.0
        %403 = vmatprep.mubr.f32.mxu0 0.0
        %404 = vmatmul.mubr.f32.gmra.mxu0 %v266
        %v405 = vpop.f32.mrf.mxu0
        %v406 = vadd.f32 0.0, %v405
        %v407 = vpop.f32.mrf.mxu0
        %v408 = vadd.f32 0.0, %v407
        %409 = vdwg.mxu0
        %vm410 = vcmask 1046528
        %v411 = vrot.slane %v193, 1
        %v412 = vrot.slane %v194, 1
        %v413 = vsel %vm410, %v411, %v412
        %v414 = vsel %vm265, %v413, 0
        %416 = vmatprep.subr.mxu0 0.0
        %417 = vmatpush1.msra.mxu0 0.0
        %418 = vmatprep.subr.mxu0 0.0
        %419 = vmatpush1.msra.mxu0 0.0
        %420 = vmatprep.subr.mxu0 0.0
        %421 = vmatpush1.msra.mxu0 0.0
        %422 = vmatprep.subr.mxu0 0.0
        %423 = vmatpush1.msra.mxu0 0.0
        %424 = vmatprep.subr.mxu0 0.0
        %425 = vmatpush1.msra.mxu0 0.0
        %426 = vmatprep.subr.mxu0 0.0
        %427 = vmatpush1.msra.mxu0 0.0
        %428 = vmatprep.subr.mxu0 0.0
        %429 = vmatpush1.msra.mxu0 0.0
        %430 = vmatprep.subr.mxu0 0.0
        %431 = vmatpush1.msra.mxu0 0.0
        %432 = vmatprep.subr.mxu0 %v224
        %433 = vmatpush1.msra.mxu0 %v223
        %434 = vmatprep.subr.mxu0 %v220
        %435 = vmatpush1.msra.mxu0 %v219
        %436 = vmatprep.subr.mxu0 %v216
        %437 = vmatpush1.msra.mxu0 %v215
        %438 = vmatprep.subr.mxu0 %v212
        %439 = vmatpush1.msra.mxu0 %v211
        %440 = vmatprep.subr.mxu0 %v208
        %441 = vmatpush1.msra.mxu0 %v207
        %442 = vmatprep.subr.mxu0 %v204
        %443 = vmatpush1.msra.mxu0 %v203
        %444 = vmatprep.subr.mxu0 %v200
        %445 = vmatpush1.msra.mxu0 %v199
        %446 = vmatprep.subr.mxu0 %v196
        %447 = vmatpush1.msra.mxu0 %v195
        %448 = vmatprep.subr.mxu0 0.0
        %449 = vmatpush2.msra.mxu0 0.0
        %450 = vmatprep.subr.mxu0 0.0
        %451 = vmatpush2.msra.mxu0 0.0
        %452 = vmatprep.subr.mxu0 0.0
        %453 = vmatpush2.msra.mxu0 0.0
        %454 = vmatprep.subr.mxu0 0.0
        %455 = vmatpush2.msra.mxu0 0.0
        %456 = vmatprep.subr.mxu0 0.0
        %457 = vmatpush2.msra.mxu0 0.0
        %458 = vmatprep.subr.mxu0 0.0
        %459 = vmatpush2.msra.mxu0 0.0
        %460 = vmatprep.subr.mxu0 0.0
        %461 = vmatpush2.msra.mxu0 0.0
        %462 = vmatprep.subr.mxu0 0.0
        %463 = vmatpush2.msra.mxu0 0.0
        %464 = vmatprep.subr.mxu0 0.0
        %465 = vmatpush2.msra.mxu0 0.0
        %466 = vmatprep.subr.mxu0 0.0
        %467 = vmatpush2.msra.mxu0 0.0
        %468 = vmatprep.subr.mxu0 0.0
        %469 = vmatpush2.msra.mxu0 0.0
        %470 = vmatprep.subr.mxu0 0.0
        %471 = vmatpush2.msra.mxu0 0.0
        %472 = vmatprep.subr.mxu0 0.0
        %473 = vmatpush2.msra.mxu0 0.0
        %474 = vmatprep.subr.mxu0 0.0
        %475 = vmatpush2.msra.mxu0 0.0
        %476 = vmatprep.subr.mxu0 0.0
        %477 = vmatpush2.msra.mxu0 0.0
        %478 = vmatprep.subr.mxu0 0.0
        %479 = vmatpush2.msra.mxu0 0.0
        %480 = vmatprep.mubr.f32.mxu0 0.0
        %481 = vmatmul.mubr.f32.gmra.mxu0 %v414
        %v482 = vpop.f32.mrf.mxu0
        %v483 = vadd.f32 %v335, %v482
        %v484 = vpop.f32.mrf.mxu0
        %v485 = vadd.f32 %v337, %v484
        %486 = vdwg.mxu0
        %487 = vmatprep.subr.mxu0 0.0
        %488 = vmatpush1.msra.mxu0 0.0
        %489 = vmatprep.subr.mxu0 0.0
        %490 = vmatpush1.msra.mxu0 0.0
        %491 = vmatprep.subr.mxu0 0.0
        %492 = vmatpush1.msra.mxu0 0.0
        %493 = vmatprep.subr.mxu0 0.0
        %494 = vmatpush1.msra.mxu0 0.0
        %495 = vmatprep.subr.mxu0 0.0
        %496 = vmatpush1.msra.mxu0 0.0
        %497 = vmatprep.subr.mxu0 0.0
        %498 = vmatpush1.msra.mxu0 0.0
        %499 = vmatprep.subr.mxu0 0.0
        %500 = vmatpush1.msra.mxu0 0.0
        %501 = vmatprep.subr.mxu0 0.0
        %502 = vmatpush1.msra.mxu0 0.0
        %503 = vmatprep.subr.mxu0 %v226
        %504 = vmatpush1.msra.mxu0 %v225
        %505 = vmatprep.subr.mxu0 %v222
        %506 = vmatpush1.msra.mxu0 %v221
        %507 = vmatprep.subr.mxu0 %v218
        %508 = vmatpush1.msra.mxu0 %v217
        %509 = vmatprep.subr.mxu0 %v214
        %510 = vmatpush1.msra.mxu0 %v213
        %511 = vmatprep.subr.mxu0 %v210
        %512 = vmatpush1.msra.mxu0 %v209
        %513 = vmatprep.subr.mxu0 %v206
        %514 = vmatpush1.msra.mxu0 %v205
        %515 = vmatprep.subr.mxu0 %v202
        %516 = vmatpush1.msra.mxu0 %v201
        %517 = vmatprep.subr.mxu0 %v198
        %518 = vmatpush1.msra.mxu0 %v197
        %519 = vmatprep.subr.mxu0 0.0
        %520 = vmatpush2.msra.mxu0 0.0
        %521 = vmatprep.subr.mxu0 0.0
        %522 = vmatpush2.msra.mxu0 0.0
        %523 = vmatprep.subr.mxu0 0.0
        %524 = vmatpush2.msra.mxu0 0.0
        %525 = vmatprep.subr.mxu0 0.0
        %526 = vmatpush2.msra.mxu0 0.0
        %527 = vmatprep.subr.mxu0 0.0
        %528 = vmatpush2.msra.mxu0 0.0
        %529 = vmatprep.subr.mxu0 0.0
        %530 = vmatpush2.msra.mxu0 0.0
        %531 = vmatprep.subr.mxu0 0.0
        %532 = vmatpush2.msra.mxu0 0.0
        %533 = vmatprep.subr.mxu0 0.0
        %534 = vmatpush2.msra.mxu0 0.0
        %535 = vmatprep.subr.mxu0 0.0
        %536 = vmatpush2.msra.mxu0 0.0
        %537 = vmatprep.subr.mxu0 0.0
        %538 = vmatpush2.msra.mxu0 0.0
        %539 = vmatprep.subr.mxu0 0.0
        %540 = vmatpush2.msra.mxu0 0.0
        %541 = vmatprep.subr.mxu0 0.0
        %542 = vmatpush2.msra.mxu0 0.0
        %543 = vmatprep.subr.mxu0 0.0
        %544 = vmatpush2.msra.mxu0 0.0
        %545 = vmatprep.subr.mxu0 0.0
        %546 = vmatpush2.msra.mxu0 0.0
        %547 = vmatprep.subr.mxu0 0.0
        %548 = vmatpush2.msra.mxu0 0.0
        %549 = vmatprep.subr.mxu0 0.0
        %550 = vmatpush2.msra.mxu0 0.0
        %551 = vmatprep.mubr.f32.mxu0 0.0
        %552 = vmatmul.mubr.f32.gmra.mxu0 %v414
        %v553 = vpop.f32.mrf.mxu0
        %v554 = vadd.f32 %v406, %v553
        %v555 = vpop.f32.mrf.mxu0
        %v556 = vadd.f32 %v408, %v555
        %557 = vdwg.mxu0
        %v558 = vld [vmem:[#allocation5 + $0x200] sm:$0xff]
        %v559 = vld [vmem:[#allocation5 + $0x208] sm:$0xff]
        %v560 = vld [vmem:[#allocation5 + $0x210] sm:$0xff]
        %v561 = vld [vmem:[#allocation5 + $0x218] sm:$0xff]
        %v562 = vld [vmem:[#allocation5 + $0x220] sm:$0xff]
        %v563 = vld [vmem:[#allocation5 + $0x228] sm:$0xff]
        %v564 = vld [vmem:[#allocation5 + $0x230] sm:$0xff]
        %v565 = vld [vmem:[#allocation5 + $0x238] sm:$0xff]
        %v566 = vld [vmem:[#allocation5 + $0x240] sm:$0xff]
        %v567 = vld [vmem:[#allocation5 + $0x248] sm:$0xff]
        %v568 = vld [vmem:[#allocation5 + $0x250] sm:$0xff]
        %v569 = vld [vmem:[#allocation5 + $0x258] sm:$0xff]
        %v570 = vld [vmem:[#allocation5 + $0x260] sm:$0xff]
        %v571 = vld [vmem:[#allocation5 + $0x268] sm:$0xff]
        %v572 = vld [vmem:[#allocation5 + $0x270] sm:$0xff]
        %v573 = vld [vmem:[#allocation5 + $0x278] sm:$0xff]
        %v574 = vld [vmem:[#allocation5 + $0x280] sm:$0xff]
        %v575 = vld [vmem:[#allocation5 + $0x288] sm:$0xff]
        %v576 = vld [vmem:[#allocation5 + $0x290] sm:$0xff]
        %v577 = vld [vmem:[#allocation5 + $0x298] sm:$0xff]
        %v578 = vld [vmem:[#allocation5 + $0x2a0] sm:$0xff]
        %v579 = vld [vmem:[#allocation5 + $0x2a8] sm:$0xff]
        %v580 = vld [vmem:[#allocation5 + $0x2b0] sm:$0xff]
        %v581 = vld [vmem:[#allocation5 + $0x2b8] sm:$0xff]
        %v582 = vld [vmem:[#allocation5 + $0x2c0] sm:$0xff]
        %v583 = vld [vmem:[#allocation5 + $0x2c8] sm:$0xff]
        %v584 = vld [vmem:[#allocation5 + $0x2d0] sm:$0xff]
        %v585 = vld [vmem:[#allocation5 + $0x2d8] sm:$0xff]
        %v586 = vld [vmem:[#allocation5 + $0x2e0] sm:$0xff]
        %v587 = vld [vmem:[#allocation5 + $0x2e8] sm:$0xff]
        %v588 = vld [vmem:[#allocation5 + $0x2f0] sm:$0xff]
        %v589 = vld [vmem:[#allocation5 + $0x2f8] sm:$0xff]
        %vm590 = vcmask 1044480
        %v591 = vrot.slane %v193, 3
        %v592 = vrot.slane %v194, 3
        %v593 = vsel %vm590, %v591, %v592
        %v594 = vsel %vm265, %v593, 0
        %596 = vmatprep.subr.mxu0 0.0
        %597 = vmatpush1.msra.mxu0 0.0
        %598 = vmatprep.subr.mxu0 0.0
        %599 = vmatpush1.msra.mxu0 0.0
        %600 = vmatprep.subr.mxu0 0.0
        %601 = vmatpush1.msra.mxu0 0.0
        %602 = vmatprep.subr.mxu0 0.0
        %603 = vmatpush1.msra.mxu0 0.0
        %604 = vmatprep.subr.mxu0 0.0
        %605 = vmatpush1.msra.mxu0 0.0
        %606 = vmatprep.subr.mxu0 0.0
        %607 = vmatpush1.msra.mxu0 0.0
        %608 = vmatprep.subr.mxu0 0.0
        %609 = vmatpush1.msra.mxu0 0.0
        %610 = vmatprep.subr.mxu0 0.0
        %611 = vmatpush1.msra.mxu0 0.0
        %612 = vmatprep.subr.mxu0 %v587
        %613 = vmatpush1.msra.mxu0 %v586
        %614 = vmatprep.subr.mxu0 %v583
        %615 = vmatpush1.msra.mxu0 %v582
        %616 = vmatprep.subr.mxu0 %v579
        %617 = vmatpush1.msra.mxu0 %v578
        %618 = vmatprep.subr.mxu0 %v575
        %619 = vmatpush1.msra.mxu0 %v574
        %620 = vmatprep.subr.mxu0 %v571
        %621 = vmatpush1.msra.mxu0 %v570
        %622 = vmatprep.subr.mxu0 %v567
        %623 = vmatpush1.msra.mxu0 %v566
        %624 = vmatprep.subr.mxu0 %v563
        %625 = vmatpush1.msra.mxu0 %v562
        %626 = vmatprep.subr.mxu0 %v559
        %627 = vmatpush1.msra.mxu0 %v558
        %628 = vmatprep.subr.mxu0 0.0
        %629 = vmatpush2.msra.mxu0 0.0
        %630 = vmatprep.subr.mxu0 0.0
        %631 = vmatpush2.msra.mxu0 0.0
        %632 = vmatprep.subr.mxu0 0.0
        %633 = vmatpush2.msra.mxu0 0.0
        %634 = vmatprep.subr.mxu0 0.0
        %635 = vmatpush2.msra.mxu0 0.0
        %636 = vmatprep.subr.mxu0 0.0
        %637 = vmatpush2.msra.mxu0 0.0
        %638 = vmatprep.subr.mxu0 0.0
        %639 = vmatpush2.msra.mxu0 0.0
        %640 = vmatprep.subr.mxu0 0.0
        %641 = vmatpush2.msra.mxu0 0.0
        %642 = vmatprep.subr.mxu0 0.0
        %643 = vmatpush2.msra.mxu0 0.0
        %644 = vmatprep.subr.mxu0 0.0
        %645 = vmatpush2.msra.mxu0 0.0
        %646 = vmatprep.subr.mxu0 0.0
        %647 = vmatpush2.msra.mxu0 0.0
        %648 = vmatprep.subr.mxu0 0.0
        %649 = vmatpush2.msra.mxu0 0.0
        %650 = vmatprep.subr.mxu0 0.0
        %651 = vmatpush2.msra.mxu0 0.0
        %652 = vmatprep.subr.mxu0 0.0
        %653 = vmatpush2.msra.mxu0 0.0
        %654 = vmatprep.subr.mxu0 0.0
        %655 = vmatpush2.msra.mxu0 0.0
        %656 = vmatprep.subr.mxu0 0.0
        %657 = vmatpush2.msra.mxu0 0.0
        %658 = vmatprep.subr.mxu0 0.0
        %659 = vmatpush2.msra.mxu0 0.0
        %660 = vmatprep.mubr.f32.mxu0 0.0
        %661 = vmatmul.mubr.f32.gmra.mxu0 %v594
        %v662 = vpop.f32.mrf.mxu0
        %v663 = vadd.f32 0.0, %v662
        %v664 = vpop.f32.mrf.mxu0
        %v665 = vadd.f32 0.0, %v664
        %666 = vdwg.mxu0
        %667 = vmatprep.subr.mxu0 0.0
        %668 = vmatpush1.msra.mxu0 0.0
        %669 = vmatprep.subr.mxu0 0.0
        %670 = vmatpush1.msra.mxu0 0.0
        %671 = vmatprep.subr.mxu0 0.0
        %672 = vmatpush1.msra.mxu0 0.0
        %673 = vmatprep.subr.mxu0 0.0
        %674 = vmatpush1.msra.mxu0 0.0
        %675 = vmatprep.subr.mxu0 0.0
        %676 = vmatpush1.msra.mxu0 0.0
        %677 = vmatprep.subr.mxu0 0.0
        %678 = vmatpush1.msra.mxu0 0.0
        %679 = vmatprep.subr.mxu0 0.0
        %680 = vmatpush1.msra.mxu0 0.0
        %681 = vmatprep.subr.mxu0 0.0
        %682 = vmatpush1.msra.mxu0 0.0
        %683 = vmatprep.subr.mxu0 %v589
        %684 = vmatpush1.msra.mxu0 %v588
        %685 = vmatprep.subr.mxu0 %v585
        %686 = vmatpush1.msra.mxu0 %v584
        %687 = vmatprep.subr.mxu0 %v581
        %688 = vmatpush1.msra.mxu0 %v580
        %689 = vmatprep.subr.mxu0 %v577
        %690 = vmatpush1.msra.mxu0 %v576
        %691 = vmatprep.subr.mxu0 %v573
        %692 = vmatpush1.msra.mxu0 %v572
        %693 = vmatprep.subr.mxu0 %v569
        %694 = vmatpush1.msra.mxu0 %v568
        %695 = vmatprep.subr.mxu0 %v565
        %696 = vmatpush1.msra.mxu0 %v564
        %697 = vmatprep.subr.mxu0 %v561
        %698 = vmatpush1.msra.mxu0 %v560
        %699 = vmatprep.subr.mxu0 0.0
        %700 = vmatpush2.msra.mxu0 0.0
        %701 = vmatprep.subr.mxu0 0.0
        %702 = vmatpush2.msra.mxu0 0.0
        %703 = vmatprep.subr.mxu0 0.0
        %704 = vmatpush2.msra.mxu0 0.0
        %705 = vmatprep.subr.mxu0 0.0
        %706 = vmatpush2.msra.mxu0 0.0
        %707 = vmatprep.subr.mxu0 0.0
        %708 = vmatpush2.msra.mxu0 0.0
        %709 = vmatprep.subr.mxu0 0.0
        %710 = vmatpush2.msra.mxu0 0.0
        %711 = vmatprep.subr.mxu0 0.0
        %712 = vmatpush2.msra.mxu0 0.0
        %713 = vmatprep.subr.mxu0 0.0
        %714 = vmatpush2.msra.mxu0 0.0
        %715 = vmatprep.subr.mxu0 0.0
        %716 = vmatpush2.msra.mxu0 0.0
        %717 = vmatprep.subr.mxu0 0.0
        %718 = vmatpush2.msra.mxu0 0.0
        %719 = vmatprep.subr.mxu0 0.0
        %720 = vmatpush2.msra.mxu0 0.0
        %721 = vmatprep.subr.mxu0 0.0
        %722 = vmatpush2.msra.mxu0 0.0
        %723 = vmatprep.subr.mxu0 0.0
        %724 = vmatpush2.msra.mxu0 0.0
        %725 = vmatprep.subr.mxu0 0.0
        %726 = vmatpush2.msra.mxu0 0.0
        %727 = vmatprep.subr.mxu0 0.0
        %728 = vmatpush2.msra.mxu0 0.0
        %729 = vmatprep.subr.mxu0 0.0
        %730 = vmatpush2.msra.mxu0 0.0
        %731 = vmatprep.mubr.f32.mxu0 0.0
        %732 = vmatmul.mubr.f32.gmra.mxu0 %v594
        %v733 = vpop.f32.mrf.mxu0
        %v734 = vadd.f32 0.0, %v733
        %v735 = vpop.f32.mrf.mxu0
        %v736 = vadd.f32 0.0, %v735
        %737 = vdwg.mxu0
        %v738 = vadd.f32 %v483, %v663
        %v739 = vadd.f32 %v485, %v665
        %v740 = vadd.f32 %v554, %v734
        %v741 = vadd.f32 %v556, %v736
        %v742 = vld [vmem:[#allocation5 + $0x300] sm:$0xff]
        %v743 = vld [vmem:[#allocation5 + $0x308] sm:$0xff]
        %v744 = vld [vmem:[#allocation5 + $0x310] sm:$0xff]
        %v745 = vld [vmem:[#allocation5 + $0x318] sm:$0xff]
        %v746 = vld [vmem:[#allocation5 + $0x320] sm:$0xff]
        %v747 = vld [vmem:[#allocation5 + $0x328] sm:$0xff]
        %v748 = vld [vmem:[#allocation5 + $0x330] sm:$0xff]
        %v749 = vld [vmem:[#allocation5 + $0x338] sm:$0xff]
        %v750 = vld [vmem:[#allocation5 + $0x340] sm:$0xff]
        %v751 = vld [vmem:[#allocation5 + $0x348] sm:$0xff]
        %v752 = vld [vmem:[#allocation5 + $0x350] sm:$0xff]
        %v753 = vld [vmem:[#allocation5 + $0x358] sm:$0xff]
        %v754 = vld [vmem:[#allocation5 + $0x360] sm:$0xff]
        %v755 = vld [vmem:[#allocation5 + $0x368] sm:$0xff]
        %v756 = vld [vmem:[#allocation5 + $0x370] sm:$0xff]
        %v757 = vld [vmem:[#allocation5 + $0x378] sm:$0xff]
        %v758 = vld [vmem:[#allocation5 + $0x380] sm:$0xff]
        %v759 = vld [vmem:[#allocation5 + $0x388] sm:$0xff]
        %v760 = vld [vmem:[#allocation5 + $0x390] sm:$0xff]
        %v761 = vld [vmem:[#allocation5 + $0x398] sm:$0xff]
        %v762 = vld [vmem:[#allocation5 + $0x3a0] sm:$0xff]
        %v763 = vld [vmem:[#allocation5 + $0x3a8] sm:$0xff]
        %v764 = vld [vmem:[#allocation5 + $0x3b0] sm:$0xff]
        %v765 = vld [vmem:[#allocation5 + $0x3b8] sm:$0xff]
        %v766 = vld [vmem:[#allocation5 + $0x3c0] sm:$0xff]
        %v767 = vld [vmem:[#allocation5 + $0x3c8] sm:$0xff]
        %v768 = vld [vmem:[#allocation5 + $0x3d0] sm:$0xff]
        %v769 = vld [vmem:[#allocation5 + $0x3d8] sm:$0xff]
        %v770 = vld [vmem:[#allocation5 + $0x3e0] sm:$0xff]
        %v771 = vld [vmem:[#allocation5 + $0x3e8] sm:$0xff]
        %v772 = vld [vmem:[#allocation5 + $0x3f0] sm:$0xff]
        %v773 = vld [vmem:[#allocation5 + $0x3f8] sm:$0xff]
        %vm774 = vcmask 1043456
        %v775 = vrot.slane %v193, 4
        %v776 = vrot.slane %v194, 4
        %v777 = vsel %vm774, %v775, %v776
        %v778 = vsel %vm265, %v777, 0
        %780 = vmatprep.subr.mxu0 0.0
        %781 = vmatpush1.msra.mxu0 0.0
        %782 = vmatprep.subr.mxu0 0.0
        %783 = vmatpush1.msra.mxu0 0.0
        %784 = vmatprep.subr.mxu0 0.0
        %785 = vmatpush1.msra.mxu0 0.0
        %786 = vmatprep.subr.mxu0 0.0
        %787 = vmatpush1.msra.mxu0 0.0
        %788 = vmatprep.subr.mxu0 0.0
        %789 = vmatpush1.msra.mxu0 0.0
        %790 = vmatprep.subr.mxu0 0.0
        %791 = vmatpush1.msra.mxu0 0.0
        %792 = vmatprep.subr.mxu0 0.0
        %793 = vmatpush1.msra.mxu0 0.0
        %794 = vmatprep.subr.mxu0 0.0
        %795 = vmatpush1.msra.mxu0 0.0
        %796 = vmatprep.subr.mxu0 %v771
        %797 = vmatpush1.msra.mxu0 %v770
        %798 = vmatprep.subr.mxu0 %v767
        %799 = vmatpush1.msra.mxu0 %v766
        %800 = vmatprep.subr.mxu0 %v763
        %801 = vmatpush1.msra.mxu0 %v762
        %802 = vmatprep.subr.mxu0 %v759
        %803 = vmatpush1.msra.mxu0 %v758
        %804 = vmatprep.subr.mxu0 %v755
        %805 = vmatpush1.msra.mxu0 %v754
        %806 = vmatprep.subr.mxu0 %v751
        %807 = vmatpush1.msra.mxu0 %v750
        %808 = vmatprep.subr.mxu0 %v747
        %809 = vmatpush1.msra.mxu0 %v746
        %810 = vmatprep.subr.mxu0 %v743
        %811 = vmatpush1.msra.mxu0 %v742
        %812 = vmatprep.subr.mxu0 0.0
        %813 = vmatpush2.msra.mxu0 0.0
        %814 = vmatprep.subr.mxu0 0.0
        %815 = vmatpush2.msra.mxu0 0.0
        %816 = vmatprep.subr.mxu0 0.0
        %817 = vmatpush2.msra.mxu0 0.0
        %818 = vmatprep.subr.mxu0 0.0
        %819 = vmatpush2.msra.mxu0 0.0
        %820 = vmatprep.subr.mxu0 0.0
        %821 = vmatpush2.msra.mxu0 0.0
        %822 = vmatprep.subr.mxu0 0.0
        %823 = vmatpush2.msra.mxu0 0.0
        %824 = vmatprep.subr.mxu0 0.0
        %825 = vmatpush2.msra.mxu0 0.0
        %826 = vmatprep.subr.mxu0 0.0
        %827 = vmatpush2.msra.mxu0 0.0
        %828 = vmatprep.subr.mxu0 0.0
        %829 = vmatpush2.msra.mxu0 0.0
        %830 = vmatprep.subr.mxu0 0.0
        %831 = vmatpush2.msra.mxu0 0.0
        %832 = vmatprep.subr.mxu0 0.0
        %833 = vmatpush2.msra.mxu0 0.0
        %834 = vmatprep.subr.mxu0 0.0
        %835 = vmatpush2.msra.mxu0 0.0
        %836 = vmatprep.subr.mxu0 0.0
        %837 = vmatpush2.msra.mxu0 0.0
        %838 = vmatprep.subr.mxu0 0.0
        %839 = vmatpush2.msra.mxu0 0.0
        %840 = vmatprep.subr.mxu0 0.0
        %841 = vmatpush2.msra.mxu0 0.0
        %842 = vmatprep.subr.mxu0 0.0
        %843 = vmatpush2.msra.mxu0 0.0
        %844 = vmatprep.mubr.f32.mxu0 0.0
        %845 = vmatmul.mubr.f32.gmra.mxu0 %v778
        %v846 = vpop.f32.mrf.mxu0
        %v847 = vadd.f32 0.0, %v846
        %v848 = vpop.f32.mrf.mxu0
        %v849 = vadd.f32 0.0, %v848
        %850 = vdwg.mxu0
        %851 = vmatprep.subr.mxu0 0.0
        %852 = vmatpush1.msra.mxu0 0.0
        %853 = vmatprep.subr.mxu0 0.0
        %854 = vmatpush1.msra.mxu0 0.0
        %855 = vmatprep.subr.mxu0 0.0
        %856 = vmatpush1.msra.mxu0 0.0
        %857 = vmatprep.subr.mxu0 0.0
        %858 = vmatpush1.msra.mxu0 0.0
        %859 = vmatprep.subr.mxu0 0.0
        %860 = vmatpush1.msra.mxu0 0.0
        %861 = vmatprep.subr.mxu0 0.0
        %862 = vmatpush1.msra.mxu0 0.0
        %863 = vmatprep.subr.mxu0 0.0
        %864 = vmatpush1.msra.mxu0 0.0
        %865 = vmatprep.subr.mxu0 0.0
        %866 = vmatpush1.msra.mxu0 0.0
        %867 = vmatprep.subr.mxu0 %v773
        %868 = vmatpush1.msra.mxu0 %v772
        %869 = vmatprep.subr.mxu0 %v769
        %870 = vmatpush1.msra.mxu0 %v768
        %871 = vmatprep.subr.mxu0 %v765
        %872 = vmatpush1.msra.mxu0 %v764
        %873 = vmatprep.subr.mxu0 %v761
        %874 = vmatpush1.msra.mxu0 %v760
        %875 = vmatprep.subr.mxu0 %v757
        %876 = vmatpush1.msra.mxu0 %v756
        %877 = vmatprep.subr.mxu0 %v753
        %878 = vmatpush1.msra.mxu0 %v752
        %879 = vmatprep.subr.mxu0 %v749
        %880 = vmatpush1.msra.mxu0 %v748
        %881 = vmatprep.subr.mxu0 %v745
        %882 = vmatpush1.msra.mxu0 %v744
        %883 = vmatprep.subr.mxu0 0.0
        %884 = vmatpush2.msra.mxu0 0.0
        %885 = vmatprep.subr.mxu0 0.0
        %886 = vmatpush2.msra.mxu0 0.0
        %887 = vmatprep.subr.mxu0 0.0
        %888 = vmatpush2.msra.mxu0 0.0
        %889 = vmatprep.subr.mxu0 0.0
        %890 = vmatpush2.msra.mxu0 0.0
        %891 = vmatprep.subr.mxu0 0.0
        %892 = vmatpush2.msra.mxu0 0.0
        %893 = vmatprep.subr.mxu0 0.0
        %894 = vmatpush2.msra.mxu0 0.0
        %895 = vmatprep.subr.mxu0 0.0
        %896 = vmatpush2.msra.mxu0 0.0
        %897 = vmatprep.subr.mxu0 0.0
        %898 = vmatpush2.msra.mxu0 0.0
        %899 = vmatprep.subr.mxu0 0.0
        %900 = vmatpush2.msra.mxu0 0.0
        %901 = vmatprep.subr.mxu0 0.0
        %902 = vmatpush2.msra.mxu0 0.0
        %903 = vmatprep.subr.mxu0 0.0
        %904 = vmatpush2.msra.mxu0 0.0
        %905 = vmatprep.subr.mxu0 0.0
        %906 = vmatpush2.msra.mxu0 0.0
        %907 = vmatprep.subr.mxu0 0.0
        %908 = vmatpush2.msra.mxu0 0.0
        %909 = vmatprep.subr.mxu0 0.0
        %910 = vmatpush2.msra.mxu0 0.0
        %911 = vmatprep.subr.mxu0 0.0
        %912 = vmatpush2.msra.mxu0 0.0
        %913 = vmatprep.subr.mxu0 0.0
        %914 = vmatpush2.msra.mxu0 0.0
        %915 = vmatprep.mubr.f32.mxu0 0.0
        %916 = vmatmul.mubr.f32.gmra.mxu0 %v778
        %v917 = vpop.f32.mrf.mxu0
        %v918 = vadd.f32 0.0, %v917
        %v919 = vpop.f32.mrf.mxu0
        %v920 = vadd.f32 0.0, %v919
        %921 = vdwg.mxu0
        %v922 = vadd.f32 %v738, %v847
        %v923 = vadd.f32 %v739, %v849
        %v924 = vadd.f32 %v740, %v918
        %v925 = vadd.f32 %v741, %v920
        %v926 = vmul.f32 %v922, %v922
        %v927 = vmul.f32 %v923, %v923
        %v928 = vmul.f32 %v924, %v924
        %v929 = vmul.f32 %v925, %v925
        %v930 = vadd.f32 %v926, %v928
        %v931 = vadd.f32 %v927, %v929
        %v932 = vrsqrt.pop %v930
        %v933 = vmul.f32 %v930, %v932
        %vm934 = vcmp.eq.f32.partialorder %v930, inf
        %v935 = vsel %vm934, %v930, %v933
        %vm936 = vcmp.eq.f32.partialorder %v930, 0.0
        %v937 = vand.u32 %v930, 2147483648
        %v938 = vsel %vm936, %v937, %v935
        %v939 = vrsqrt.pop %v931
        %v940 = vmul.f32 %v931, %v939
        %vm941 = vcmp.eq.f32.partialorder %v931, inf
        %v942 = vsel %vm941, %v931, %v940
        %vm943 = vcmp.eq.f32.partialorder %v931, 0.0
        %v944 = vand.u32 %v931, 2147483648
        %v945 = vsel %vm943, %v944, %v942
        %946 = vst [vmem:[%s190] sm:$0xff] %v938
        %947 = vst [vmem:[%s190 + $0x8] sm:$0xff] %v945
        %s948 = sand.u32 %s89, 1
        %s949 = scalar_lea.sflag [#allocation4], %s948
        %s950 = sand.u32 %s89, 1
        %s951 = smul.addr %s950, 16
        %s952 = scalar_lea.vmem [#allocation7], %s951
        // Predicated region
        $region37: #{tpu_custom_call.1} parent=27 // pred_check
          %p953 = pneg %p99
        $region38: #{tpu_custom_call.1} parent=27 // pred_check_branch
          %955 = sbr.rel (%p953) target = $region40
        $region39: #{tpu_custom_call.1} parent=27 // pred_region
          %s957 = ssub.s32 256, 256
          %958 = vsyncadd %s949, %s957
          %s959 = smul.addr %s25, 2
          %s960 = smul.addr %s24, 2
          %s961 = sadd.s32 %s959, %s960
          %s962 = smul.addr %s961, 128
          %s963 = scalar_lea.hbm %s2, %s962
          %s965 = sshll.u32 %s952, 4
          %s966 = int_to_ptr.vmem [resolvable:$true] %s965
          %968 = dma.vmem_to_hbm [thread:$0]  %s966, 256, %s963, %s949
        $region40: #{tpu_custom_call.1} parent=27 // pred_fallthru
          _
      $region28: #{tpu_custom_call.1} parent=5 // pred_fallthru
        _
      %p969 = scmp.le.s32.totalorder 2, %s15
      // Predicated region
      $region41: #{tpu_custom_call.1} parent=5 // pred_check
        %p970 = pneg %p969
      $region42: #{tpu_custom_call.1} parent=5 // pred_check_branch
        %972 = sbr.rel (%p970) target = $region44
      $region43: #{tpu_custom_call.1} parent=5 // pred_region
        %s973 = ssub.s32 %s15, 2
        // Predicated region
        $region45: #{tpu_custom_call.1} parent=43 // pred_check
          %p974 = pneg %p105
        $region46: #{tpu_custom_call.1} parent=43 // pred_check_branch
          %976 = sbr.rel (%p974) target = $region48
        $region47: #{tpu_custom_call.1} parent=43 // pred_region
          %s977 = sand.u32 %s90, 1
          %s978 = scalar_lea.sflag [#allocation4], %s977
          %s979 = sand.u32 %s90, 1
          %s980 = smul.addr %s979, 16
          %s981 = scalar_lea.vmem [#allocation7], %s980
          %982 = dma.done %s978, 256
        $region48: #{tpu_custom_call.1} parent=43 // pred_fallthru
          _
      $region44: #{tpu_custom_call.1} parent=5 // pred_fallthru
        _
    $region6: #{tpu_custom_call.1} parent=1 // loop_footer
      %s19 = sadd.s32 1, %s15
    $region7: #{tpu_custom_call.1} parent=1 // loop_footer_branch
      %14 = sbr.rel target = $region3
    $region8: #{tpu_custom_call.1} parent=1 // loop_exit
      _
    %983 = vsyncpa [#allocation3], 1
    %s984 = scalar_lea.sflag [#allocation3], 1
    %985 = vsyncpa %s984, 1
    %986 = vsyncpa [#allocation6], 1
    %987 = vsyncpa [#allocation4], 1
    %s988 = scalar_lea.sflag [#allocation4], 1
    %989 = vsyncpa %s988, 1

</llo_original>
